<compile_context>
chip_gen: v5e
topology: v5e:2x2
jax: 0.10.0
libtpu: 0.0.40
codegen_flags: <defaults>
</compile_context>

<pallas_src>
import functools

import jax
import jax.numpy as jnp
from jax.experimental import pallas as pl
from jax.experimental.pallas import tpu as pltpu

INPUT_DIM = 4
HIDDEN_DIM = 128
OUTPUT_DIM = 2


def policy_kernel(x_ref, w1_ref, b1_ref, wd_ref, bd_ref, o_ref):
    # fc1 + ReLU on the MXU.  K=4 is a nearly-empty systolic pass, but the MXU
    # is otherwise idle, so this is free capacity and keeps the VPU/XLU clear.
    h = jnp.dot(x_ref[...], w1_ref[...], preferred_element_type=jnp.float32)
    h = jnp.maximum(h + b1_ref[...], 0.0)                       # [tb, H]

    # fc2 + softmax over 2 classes, fused:
    #   softmax([z0, z1]) == sigmoid([z0 - z1, z1 - z0])
    # wd/bd already hold the +/- logit differences, so this is a single MXU
    # contraction plus an EUP exp and an elementwise reciprocal.
    z = jnp.dot(h, wd_ref[...], preferred_element_type=jnp.float32) + bd_ref[...]
    o_ref[...] = 1.0 / (1.0 + jnp.exp(-z))                      # [tb, 2] narrow store


@functools.partial(jax.jit, static_argnames=("block_b",))
def policy_network_forward(x, w1, b1, w2, b2, *, block_b=2048):
    B = x.shape[0]

    # Normalize parameter shapes (handles PyTorch-style 1-D biases too).
    w1 = w1.reshape(INPUT_DIM, HIDDEN_DIM)
    b1 = jnp.asarray(b1).reshape(1, HIDDEN_DIM)
    w2 = w2.reshape(HIDDEN_DIM, OUTPUT_DIM)
    b2 = jnp.asarray(b2).reshape(1, OUTPUT_DIM)

    # Precompute the logit-difference form of fc2 (+softmax fusion):
    # column 0 -> z0 - z1 (gives p0), column 1 -> z1 - z0 (gives p1).
    wd = jnp.concatenate([w2[:, :1] - w2[:, 1:], w2[:, 1:] - w2[:, :1]], axis=1)  # [H, 2]
    bd = jnp.concatenate([b2[:, :1] - b2[:, 1:], b2[:, 1:] - b2[:, :1]], axis=1)  # [1, 2]

    # Batch tiling: multiple-of-8 sublane tiles; only pad if the batch is
    # ragged w.r.t. the tile (common aligned case: no extra HBM pass).
    b8 = ((B + 7) // 8) * 8
    tb = max(8, min((block_b // 8) * 8, b8))
    if b8 >= 1024 and b8 <= tb:
        # Enough work to split: keep grid_b >= 2 so both v7x TensorCores run.
        half = (b8 + 1) // 2
        tb = ((half + 7) // 8) * 8
    grid_b = pl.cdiv(b8, tb)
    b_pad = grid_b * tb
    x_in = x if b_pad == B else jnp.pad(x, ((0, b_pad - B), (0, 0)))

    out = pl.pallas_call(
        policy_kernel,
        out_shape=jax.ShapeDtypeStruct((b_pad, OUTPUT_DIM), jnp.float32),
        grid=(grid_b,),
        in_specs=[
            pl.BlockSpec((tb, INPUT_DIM), lambda i: (i, 0)),           # x: batch-tiled
            pl.BlockSpec((INPUT_DIM, HIDDEN_DIM), lambda i: (0, 0)),   # w1: VMEM-resident
            pl.BlockSpec((1, HIDDEN_DIM), lambda i: (0, 0)),           # b1: resident
            pl.BlockSpec((HIDDEN_DIM, OUTPUT_DIM), lambda i: (0, 0)),  # wd: resident
            pl.BlockSpec((1, OUTPUT_DIM), lambda i: (0, 0)),           # bd: resident
        ],
        out_specs=pl.BlockSpec((tb, OUTPUT_DIM), lambda i: (i, 0)),
        compiler_params=pltpu.CompilerParams(
            dimension_semantics=("parallel",),
        ),
    )(x_in, w1, b1, wd, bd)

    return out if b_pad == B else out[:B]


def init_params(key):
    """Deterministic init mimicking nn.Linear defaults: U(-1/sqrt(fan_in), 1/sqrt(fan_in))."""
    k1, k2, k3, k4 = jax.random.split(key, 4)
    bound1 = 1.0 / jnp.sqrt(float(INPUT_DIM))
    bound2 = 1.0 / jnp.sqrt(float(HIDDEN_DIM))
    # Stored transposed relative to PyTorch ([in, out]) so the kernel does x @ w.
    w1 = jax.random.uniform(k1, (INPUT_DIM, HIDDEN_DIM), jnp.float32, -bound1, bound1)
    b1 = jax.random.uniform(k2, (1, HIDDEN_DIM), jnp.float32, -bound1, bound1)
    w2 = jax.random.uniform(k3, (HIDDEN_DIM, OUTPUT_DIM), jnp.float32, -bound2, bound2)
    b2 = jax.random.uniform(k4, (1, OUTPUT_DIM), jnp.float32, -bound2, bound2)
    return w1, b1, w2, b2


def reference_forward(x, w1, b1, w2, b2):
    h = jnp.maximum(x @ w1 + b1, 0.0)
    logits = h @ w2 + b2
    return jax.nn.softmax(logits, axis=-1)


if __name__ == "__main__":
    key = jax.random.PRNGKey(0)
    kx, kp = jax.random.split(key)

    w1, b1, w2, b2 = init_params(kp)

    # Small aligned batch.
    B = 8
    x = jax.random.normal(kx, (B, INPUT_DIM), dtype=jnp.float32)
    out = jax.block_until_ready(policy_network_forward(x, w1, b1, w2, b2))
    ref = reference_forward(x, w1, b1, w2, b2)
    assert out.shape == (B, OUTPUT_DIM)
    assert jnp.allclose(out, ref, atol=1e-5, rtol=1e-5)
    assert jnp.allclose(jnp.sum(out, axis=-1), 1.0, atol=1e-5)  # softmax rows sum to 1

    # Ragged batch exercises the tile-padding / row-slice path.
    B2 = 37
    x2 = jax.random.normal(kx, (B2, INPUT_DIM), dtype=jnp.float32)
    out2 = jax.block_until_ready(policy_network_forward(x2, w1, b1, w2, b2))
    ref2 = reference_forward(x2, w1, b1, w2, b2)
    assert out2.shape == (B2, OUTPUT_DIM)
    assert jnp.allclose(out2, ref2, atol=1e-5, rtol=1e-5)

    print("KERNEL_OK")
</pallas_src>

<mosaic_0001>
module attributes {stable_mosaic.version = 11 : i64} {
  func.func @policy_kernel(%arg0: i32, %arg1: memref<8x4xf32, #tpu.memory_space<vmem>>, %arg2: memref<4x128xf32, #tpu.memory_space<vmem>>, %arg3: memref<1x128xf32, #tpu.memory_space<vmem>>, %arg4: memref<128x2xf32, #tpu.memory_space<vmem>>, %arg5: memref<1x2xf32, #tpu.memory_space<vmem>>, %arg6: memref<8x2xf32, #tpu.memory_space<vmem>>) attributes {dimension_semantics = [#tpu.dimension_semantics<parallel>], iteration_bounds = array<i64: 1>, scalar_prefetch = 0 : i64, scratch_operands = 0 : i64, tpu.core_type = #tpu.core_type<tc>, window_params = [{transform_indices = @transform_0, window_bounds = array<i64: 8, 4>}, {pipeline_mode = #tpu.pipeline_mode<synchronous>, transform_indices = @transform_1, window_bounds = array<i64: 4, 128>}, {pipeline_mode = #tpu.pipeline_mode<synchronous>, transform_indices = @transform_2, window_bounds = array<i64: 1, 128>}, {pipeline_mode = #tpu.pipeline_mode<synchronous>, transform_indices = @transform_3, window_bounds = array<i64: 128, 2>}, {pipeline_mode = #tpu.pipeline_mode<synchronous>, transform_indices = @transform_4, window_bounds = array<i64: 1, 2>}, {transform_indices = @transform_5, window_bounds = array<i64: 8, 2>}]} {
    %c0 = arith.constant 0 : index
    %c0_0 = arith.constant 0 : index
    %0 = vector.load %arg1[%c0, %c0_0] : memref<8x4xf32, #tpu.memory_space<vmem>>, vector<8x4xf32>
    %c0_1 = arith.constant 0 : index
    %c0_2 = arith.constant 0 : index
    %1 = vector.load %arg2[%c0_1, %c0_2] : memref<4x128xf32, #tpu.memory_space<vmem>>, vector<4x128xf32>
    %cst = arith.constant dense<0.000000e+00> : vector<8x128xf32>
    %2 = tpu.matmul %0, %1, %cst {dimension_numbers = #tpu.dot_dimension_numbers<[1], [0], [0], [1], [0, 0, 1, 1], [], []>} : vector<8x4xf32>, vector<4x128xf32>, vector<8x128xf32> -> vector<8x128xf32>
    %c0_3 = arith.constant 0 : index
    %c0_4 = arith.constant 0 : index
    %3 = vector.load %arg3[%c0_3, %c0_4] : memref<1x128xf32, #tpu.memory_space<vmem>>, vector<1x128xf32>
    %4 = vector.broadcast %3 : vector<1x128xf32> to vector<8x128xf32>
    %5 = arith.addf %2, %4 : vector<8x128xf32>
    %cst_5 = arith.constant 0.000000e+00 : f32
    %6 = vector.broadcast %cst_5 : f32 to vector<8x128xf32>
    %7 = arith.maximumf %5, %6 : vector<8x128xf32>
    %c0_6 = arith.constant 0 : index
    %c0_7 = arith.constant 0 : index
    %8 = vector.load %arg4[%c0_6, %c0_7] : memref<128x2xf32, #tpu.memory_space<vmem>>, vector<128x2xf32>
    %cst_8 = arith.constant dense<0.000000e+00> : vector<8x2xf32>
    %9 = tpu.matmul %7, %8, %cst_8 {dimension_numbers = #tpu.dot_dimension_numbers<[1], [0], [0], [1], [0, 0, 1, 1], [], []>} : vector<8x128xf32>, vector<128x2xf32>, vector<8x2xf32> -> vector<8x2xf32>
    %c0_9 = arith.constant 0 : index
    %c0_10 = arith.constant 0 : index
    %10 = vector.load %arg5[%c0_9, %c0_10] : memref<1x2xf32, #tpu.memory_space<vmem>>, vector<1x2xf32>
    %11 = vector.broadcast %10 : vector<1x2xf32> to vector<8x2xf32>
    %12 = arith.addf %9, %11 : vector<8x2xf32>
    %cst_11 = arith.constant 0.000000e+00 : f32
    %13 = vector.broadcast %cst_11 : f32 to vector<8x2xf32>
    %14 = arith.subf %13, %12 : vector<8x2xf32>
    %15 = math.exp %14 : vector<8x2xf32>
    %cst_12 = arith.constant 1.000000e+00 : f32
    %16 = vector.broadcast %cst_12 : f32 to vector<8x2xf32>
    %17 = arith.addf %16, %15 : vector<8x2xf32>
    %cst_13 = arith.constant 1.000000e+00 : f32
    %18 = vector.broadcast %cst_13 : f32 to vector<8x2xf32>
    %19 = arith.divf %18, %17 : vector<8x2xf32>
    %c0_14 = arith.constant 0 : index
    %c0_15 = arith.constant 0 : index
    %20 = vector.load %arg6[%c0_14, %c0_15] : memref<8x2xf32, #tpu.memory_space<vmem>>, vector<8x2xf32>
    tpu.vector_store %arg6[%c0_14, %c0_15], %19 {strides = array<i32>} : memref<8x2xf32, #tpu.memory_space<vmem>>, vector<8x2xf32>,
    return
  }
  func.func @transform_0(%arg0: i32) -> (i32, i32) {
    %c0_i32 = arith.constant 0 : i32
    %c0_i32_0 = arith.constant 0 : i32
    return %arg0, %c0_i32 : i32, i32
  }
  func.func @transform_1(%arg0: i32) -> (i32, i32) {
    %c0_i32 = arith.constant 0 : i32
    %c0_i32_0 = arith.constant 0 : i32
    %c0_i32_1 = arith.constant 0 : i32
    return %c0_i32, %c0_i32_0 : i32, i32
  }
  func.func @transform_2(%arg0: i32) -> (i32, i32) {
    %c0_i32 = arith.constant 0 : i32
    %c0_i32_0 = arith.constant 0 : i32
    %c0_i32_1 = arith.constant 0 : i32
    return %c0_i32, %c0_i32_0 : i32, i32
  }
  func.func @transform_3(%arg0: i32) -> (i32, i32) {
    %c0_i32 = arith.constant 0 : i32
    %c0_i32_0 = arith.constant 0 : i32
    %c0_i32_1 = arith.constant 0 : i32
    return %c0_i32, %c0_i32_0 : i32, i32
  }
  func.func @transform_4(%arg0: i32) -> (i32, i32) {
    %c0_i32 = arith.constant 0 : i32
    %c0_i32_0 = arith.constant 0 : i32
    %c0_i32_1 = arith.constant 0 : i32
    return %c0_i32, %c0_i32_0 : i32, i32
  }
  func.func @transform_5(%arg0: i32) -> (i32, i32) {
    %c0_i32 = arith.constant 0 : i32
    %c0_i32_0 = arith.constant 0 : i32
    return %arg0, %c0_i32 : i32, i32
  }
}

</mosaic_0001>

<llo_original>
// kernel: policy_network_forward.1
$region0: #{policy_network_forward.1}
  #allocation0 [shape = 'u32[]', space=smem, size = 0x4, offset = 0x4, fixed_abs, tag = 'smem constant byte address 0x4 - core index']
  #allocation1 [shape = 'u32[72,128]{1,0:T(1,128)}', space=vmem, size = 0x9000, scoped, tag = 'internal scratch']
  %s0 = inlined_call_operand.vmem [shape: f32[8,4], index: 0, kind: input, shape index: {}]
  %s1 = inlined_call_operand.vmem [shape: f32[4,128], index: 1, kind: input, shape index: {}]
  %s2 = inlined_call_operand.vmem [shape: f32[1,128], index: 2, kind: input, shape index: {}]
  %s3 = inlined_call_operand.vmem [shape: f32[128,2], index: 3, kind: input, shape index: {}]
  %s4 = inlined_call_operand.vmem [shape: f32[1,2], index: 4, kind: input, shape index: {}]
  %s5 = inlined_call_operand.vmem [shape: f32[8,2], index: 5, kind: output, shape index: {}]
  %s6 = sld [smem:[#allocation0]]
  $region30: #{policy_network_forward.1} parent=0
    _
  %s8 = ssub.s32 1, %s6
  %s9 = scalar_select 0, %s8, %s6
  // Predicated region
  $region2: #{policy_network_forward.1} parent=0 // pred_check
    _
  $region3: #{policy_network_forward.1} parent=0 // pred_check_branch
    %11 = sbr.rel (0) target = $region5
  $region4: #{policy_network_forward.1} parent=0 // pred_region
    _
  $region5: #{policy_network_forward.1} parent=0 // pred_fallthru
    _
  // Predicated region
  $region6: #{policy_network_forward.1} parent=0 // pred_check
    _
  $region7: #{policy_network_forward.1} parent=0 // pred_check_branch
    %13 = sbr.rel (0) target = $region9
  $region8: #{policy_network_forward.1} parent=0 // pred_region
    _
  $region9: #{policy_network_forward.1} parent=0 // pred_fallthru
    _
  // Predicated region
  $region10: #{policy_network_forward.1} parent=0 // pred_check
    _
  $region11: #{policy_network_forward.1} parent=0 // pred_check_branch
    %15 = sbr.rel (0) target = $region13
  $region12: #{policy_network_forward.1} parent=0 // pred_region
    _
  $region13: #{policy_network_forward.1} parent=0 // pred_fallthru
    _
  // Predicated region
  $region14: #{policy_network_forward.1} parent=0 // pred_check
    _
  $region15: #{policy_network_forward.1} parent=0 // pred_check_branch
    %17 = sbr.rel (0) target = $region17
  $region16: #{policy_network_forward.1} parent=0 // pred_region
    _
  $region17: #{policy_network_forward.1} parent=0 // pred_fallthru
    _
  // Predicated region
  $region18: #{policy_network_forward.1} parent=0 // pred_check
    _
  $region19: #{policy_network_forward.1} parent=0 // pred_check_branch
    %19 = sbr.rel (0) target = $region21
  $region20: #{policy_network_forward.1} parent=0 // pred_region
    _
  $region21: #{policy_network_forward.1} parent=0 // pred_fallthru
    _
  %v20 = vld [vmem:[%s0] sm:$0xff]
  %v21 = vld [vmem:[%s1] sm:$0xf]
  %v22 = vld [vmem:[%s2] sm:$0x1]
  %v24 = vperm.slane %v22, 0
  %vm26 = vcmask 31744
  %v28 = vsel %vm26, %v20, 0
  %vm30 = vcmask 1043456
  %v32 = vsel %vm30, %v21, 0
  %34 = vmatpush.msra.mxu0 0.0
  %35 = vmatpush.msra.mxu0 0.0
  %36 = vmatpush.msra.mxu0 0.0
  %37 = vmatpush.msra.mxu0 0.0
  %38 = vmatpush.msra.mxu0 0.0
  %39 = vmatpush.msra.mxu0 0.0
  %40 = vmatpush.msra.mxu0 0.0
  %41 = vmatpush.msra.mxu0 0.0
  %42 = vmatpush.msra.mxu0 0.0
  %43 = vmatpush.msra.mxu0 0.0
  %44 = vmatpush.msra.mxu0 0.0
  %45 = vmatpush.msra.mxu0 0.0
  %46 = vmatpush.msra.mxu0 0.0
  %47 = vmatpush.msra.mxu0 0.0
  %48 = vmatpush.msra.mxu0 0.0
  %49 = vmatpush.msra.mxu0 %v32
  %50 = vmatmul.f32.gmra.mxu0 %v28
  %v51 = vpop.f32.mrf.mxu0
  %v52 = vadd.f32 %v24, %v51
  %53 = vdwg.mxu0
  %v54 = vmax.f32 %v52, 0.0
  %v55 = vld [vmem:[%s3] sm:$0xff]
  %v56 = vld [vmem:[%s3 + $0x8] sm:$0xff]
  %v57 = vld [vmem:[%s3 + $0x10] sm:$0xff]
  %v58 = vld [vmem:[%s3 + $0x18] sm:$0xff]
  %v59 = vld [vmem:[%s3 + $0x20] sm:$0xff]
  %v60 = vld [vmem:[%s3 + $0x28] sm:$0xff]
  %v61 = vld [vmem:[%s3 + $0x30] sm:$0xff]
  %v62 = vld [vmem:[%s3 + $0x38] sm:$0xff]
  %v63 = vld [vmem:[%s3 + $0x40] sm:$0xff]
  %v64 = vld [vmem:[%s3 + $0x48] sm:$0xff]
  %v65 = vld [vmem:[%s3 + $0x50] sm:$0xff]
  %v66 = vld [vmem:[%s3 + $0x58] sm:$0xff]
  %v67 = vld [vmem:[%s3 + $0x60] sm:$0xff]
  %v68 = vld [vmem:[%s3 + $0x68] sm:$0xff]
  %v69 = vld [vmem:[%s3 + $0x70] sm:$0xff]
  %v70 = vld [vmem:[%s3 + $0x78] sm:$0xff]
  %v71 = vld [vmem:[%s4] sm:$0x1]
  %v73 = vperm.slane %v71, 0
  %75 = vmatpush.msra.mxu0 %v70
  %76 = vmatpush.msra.mxu0 %v69
  %77 = vmatpush.msra.mxu0 %v68
  %78 = vmatpush.msra.mxu0 %v67
  %79 = vmatpush.msra.mxu0 %v66
  %80 = vmatpush.msra.mxu0 %v65
  %81 = vmatpush.msra.mxu0 %v64
  %82 = vmatpush.msra.mxu0 %v63
  %83 = vmatpush.msra.mxu0 %v62
  %84 = vmatpush.msra.mxu0 %v61
  %85 = vmatpush.msra.mxu0 %v60
  %86 = vmatpush.msra.mxu0 %v59
  %87 = vmatpush.msra.mxu0 %v58
  %88 = vmatpush.msra.mxu0 %v57
  %89 = vmatpush.msra.mxu0 %v56
  %90 = vmatpush.msra.mxu0 %v55
  %91 = vmatmul.f32.gmra.mxu0 %v54
  %v92 = vpop.f32.mrf.mxu0
  %v93 = vadd.f32 %v73, %v92
  %94 = vdwg.mxu0
  %v95 = vsub.f32 0.0, %v93
  %v96 = vmul.f32 %v95, 1.442695
  %v97 = vpow.pop %v96
  %v98 = vadd.f32 %v97, 1.0
  %v99 = vrcp.pop %v98
  %v100 = vmul.f32 %v98, %v99
  %v101 = vsub.f32 1.0, %v100
  %v102 = vmul.f32 %v99, %v101
  %v103 = vadd.f32 %v99, %v102
  %vm104 = vweird.f32 %v98
  %vm105 = vweird.f32 %v99
  %vm106 = vmor %vm104, %vm105
  %v107 = vsel %vm106, %v99, %v103
  %v108 = vand.u32 2147483647, %v98
  %vm109 = vcmp.eq.f32.partialorder %v108, 8.507059e+37
  %v110 = vand.u32 %v98, 2147483648
  %v111 = vor.u32 1.1754944e-38, %v110
  %v112 = vsel %vm109, %v111, %v107
  %v113 = vmul.f32 1.0, %v112
  %vm114 = vcmask 15360
  %115 = vst.msk [vmem:[%s5] sm:$0xff] %vm114, %v113
  // Predicated region
  $region22: #{policy_network_forward.1} parent=0 // pred_check
    _
  $region23: #{policy_network_forward.1} parent=0 // pred_check_branch
    %117 = sbr.rel (0) target = $region25
  $region24: #{policy_network_forward.1} parent=0 // pred_region
    _
  $region25: #{policy_network_forward.1} parent=0 // pred_fallthru
    _
  // Predicated region
  $region26: #{policy_network_forward.1} parent=0 // pred_check
    _
  $region27: #{policy_network_forward.1} parent=0 // pred_check_branch
    %119 = sbr.rel (0) target = $region29
  $region28: #{policy_network_forward.1} parent=0 // pred_region
    _
  $region29: #{policy_network_forward.1} parent=0 // pred_fallthru
    _

</llo_original>
